<compile_context>
chip_gen: v7x
topology: tpu7x:2x2x1
jax: 0.10.0
libtpu: 0.0.40
codegen_flags: <defaults>
</compile_context>

<pallas_src>
import functools

import jax
import jax.numpy as jnp
from jax.experimental import pallas as pl
from jax.experimental.pallas import tpu as pltpu

LANES = 128
SUBLANES = 8
MAX_TILE_ROWS = 2048   # (2048,128) f32 block = 1 MiB; 2 inputs x 2 buffers = 4 MiB VMEM
SUB_ROWS = 512         # compute granularity inside a block (bounds VMEM temporaries)
NUM_CORES = 2          # leading "parallel" axis (used only when there is enough work)


def _focal_loss_kernel(logits_ref, targets_ref, out_ref, *, alpha, gamma,
                       rows_valid, tile_rows, sub_rows, chunks_per_core,
                       approx_sigmoid):
    c = pl.program_id(0)          # core-parallel axis
    i = pl.program_id(1)          # sequential reduction axis

    @pl.when(i == 0)
    def _():
        out_ref[...] = jnp.zeros_like(out_ref)

    chunk = c * chunks_per_core + i          # logical chunk id (may be phantom)
    block_row0 = chunk * tile_rows           # first global row of this block
    num_subs = tile_rows // sub_rows
    folds = sub_rows // SUBLANES

    alpha = float(alpha)
    a0 = 1.0 - alpha
    a1 = 2.0 * alpha - 1.0

    def fold(v):
        # (sub_rows,128) -> (8,128) partial sums; tile-layout-preserving
        # reshape + vreg adds over the major (non-tiled) axis.
        return jnp.sum(v.reshape(folds, SUBLANES, LANES), axis=0)

    def process(j, carry):
        r0 = j * sub_rows
        if num_subs > 1:
            r0 = pl.multiple_of(r0, SUBLANES)
        x = logits_ref[pl.ds(r0, sub_rows), :].astype(jnp.float32)
        t = targets_ref[pl.ds(r0, sub_rows), :].astype(jnp.float32)

        # One shared exp(-|x|) feeds both the sigmoid and the stable BCE term.
        e = jnp.exp(-jnp.abs(x))
        den = 1.0 + e
        if approx_sigmoid:
            s = pl.reciprocal(den, approx=True)   # EUP vrcp; frees VALU ops
        else:
            s = 1.0 / den
        probs = jnp.where(x >= 0.0, s, 1.0 - s)   # sigmoid(x)

        # 1 - pt  with pt = p*t + (1-p)*(1-t)   ==>   p + t - 2*p*t
        one_minus_pt = probs + t - 2.0 * (probs * t)
        # alpha*t + (1-alpha)*(1-t)             ==>   (1-alpha) + (2a-1)*t
        alpha_factor = a0 + a1 * t

        # Integer-gamma specialization: VPU multiplies instead of EUP pow.
        g = float(gamma)
        if g == 0.0:
            pow_term = jnp.ones_like(one_minus_pt)
        elif g == float(int(g)) and 1 <= int(g) <= 8:
            pow_term = one_minus_pt
            for _ in range(int(g) - 1):
                pow_term = pow_term * one_minus_pt
        else:
            pow_term = jnp.power(one_minus_pt, g)
        focal_weight = alpha_factor * pow_term

        # Numerically stable BCE-with-logits: max(x,0) - x*t + log1p(exp(-|x|))
        bce = jnp.maximum(x, 0.0) - x * t + jnp.log1p(e)
        loss = focal_weight * bce

        sub_row0 = block_row0 + j * sub_rows

        # Interior sub-slices: fully valid, zero masking work.
        @pl.when(sub_row0 + sub_rows <= rows_valid)
        def _():
            out_ref[...] += fold(loss)

        # Boundary / phantom sub-slices: mask at whole-row granularity (the
        # kernel only ever owns whole valid 128-lane rows; the sub-row tail is
        # handled by the wrapper's pure-JAX epilogue).
        @pl.when(sub_row0 + sub_rows > rows_valid)
        def _():
            row_idx = sub_row0 + jax.lax.broadcasted_iota(jnp.int32, loss.shape, 0)
            out_ref[...] += fold(jnp.where(row_idx < rows_valid, loss, 0.0))

        return carry

    if num_subs == 1:
        process(0, 0)
    else:
        jax.lax.fori_loop(0, num_subs, process, 0, unroll=True)


def _focal_elems_f32(x, t, alpha, gamma):
    """Elementwise focal loss (pure JAX) for the tiny unaligned tail."""
    probs = jax.nn.sigmoid(x)
    one_minus_pt = probs + t - 2.0 * probs * t
    alpha_factor = (1.0 - alpha) + (2.0 * alpha - 1.0) * t
    focal_weight = alpha_factor * jnp.power(one_minus_pt, gamma)
    bce = jnp.maximum(x, 0.0) - x * t + jnp.log1p(jnp.exp(-jnp.abs(x)))
    return focal_weight * bce


def binary_focal_loss(logits, targets, alpha=0.01, gamma=2.0,
                      reduction="mean", approx_sigmoid=True):
    """Pallas TPU implementation of BinaryFocalLoss.forward (scalar reductions)."""
    assert logits.shape == targets.shape
    n = int(logits.size)

    if reduction == "mean":
        denom = float(n)
    elif reduction == "sum":
        denom = 1.0
    else:
        # TODO(synk): reduction='none' (elementwise output) not wired up; only
        # scalar reductions are implemented in the kernel.
        raise NotImplementedError("only 'mean' and 'sum' reductions supported")

    flat_l = logits.reshape(-1)
    flat_t = targets.reshape(-1)

    # Sub-32-bit inputs need taller min tiles ((16,128) bf16, (32,128) int8).
    min_bytes = min(jnp.dtype(logits.dtype).itemsize,
                    jnp.dtype(targets.dtype).itemsize)
    if min_bytes >= 4:
        row_align = SUBLANES
    elif min_bytes == 2:
        row_align = 16
    else:
        row_align = 32

    # The kernel covers whole groups of `row_align` 128-lane rows (free
    # reshape, no jnp.pad copy); the remaining < row_align*128 elements are
    # folded in with a tiny pure-JAX epilogue.
    align_elems = row_align * LANES
    n_kernel = (n // align_elems) * align_elems
    rows = n_kernel // LANES

    total = jnp.zeros((), jnp.float32)

    if rows > 0:
        tile_rows = min(MAX_TILE_ROWS, rows)
        if tile_rows > SUB_ROWS:
            tile_rows = (tile_rows // SUB_ROWS) * SUB_ROWS
        sub_rows = min(SUB_ROWS, tile_rows)
        num_chunks = pl.cdiv(rows, tile_rows)

        # Only use the core-parallel leading axis when there is enough work;
        # on single-TC v5e/v6e it is just a serial loop over padded chunks.
        # TODO(synk): on v7x, verify the "parallel" axis is actually sharded
        # across both TensorCores (else switch to pltpu.CORE_PARALLEL).
        num_cores = NUM_CORES if num_chunks >= 2 * NUM_CORES else 1
        chunks_per_core = pl.cdiv(num_chunks, num_cores)
        last_chunk = num_chunks - 1

        main_l = flat_l if n_kernel == n else flat_l[:n_kernel]
        main_t = flat_t if n_kernel == n else flat_t[:n_kernel]
        l2 = main_l.reshape(rows, LANES)
        t2 = main_t.reshape(rows, LANES)

        kernel = functools.partial(
            _focal_loss_kernel, alpha=float(alpha), gamma=float(gamma),
            rows_valid=rows, tile_rows=tile_rows, sub_rows=sub_rows,
            chunks_per_core=chunks_per_core, approx_sigmoid=approx_sigmoid)

        def in_index_map(c, i):
            # Clamp phantom chunks (uneven core split) onto the last real
            # block; their contribution is masked to zero in-kernel.
            return (jnp.minimum(c * chunks_per_core + i, last_chunk), 0)

        in_spec = pl.BlockSpec((tile_rows, LANES), in_index_map)

        part = pl.pallas_call(
            kernel,
            out_shape=jax.ShapeDtypeStruct((num_cores * SUBLANES, LANES),
                                           jnp.float32),
            grid_spec=pltpu.PrefetchScalarGridSpec(
                num_scalar_prefetch=0,
                grid=(num_cores, chunks_per_core),
                in_specs=[in_spec, in_spec],
                out_specs=pl.BlockSpec((SUBLANES, LANES), lambda c, i: (c, 0)),
            ),
            compiler_params=pltpu.CompilerParams(
                dimension_semantics=("parallel", "arbitrary")),
        )(l2, t2)
        total = total + jnp.sum(part)

    if n_kernel < n:
        tail_l = flat_l[n_kernel:].astype(jnp.float32)
        tail_t = flat_t[n_kernel:].astype(jnp.float32)
        total = total + jnp.sum(
            _focal_elems_f32(tail_l, tail_t, float(alpha), float(gamma)))

    return total / jnp.float32(denom)


def binary_focal_loss_ref(logits, targets, alpha=0.01, gamma=2.0,
                          reduction="mean"):
    """Pure-JAX reference mirroring the PyTorch forward."""
    x = logits.astype(jnp.float32)
    t = targets.astype(jnp.float32)
    probs = jax.nn.sigmoid(x)
    pt = probs * t + (1 - probs) * (1 - t)
    alpha_factor = alpha * t + (1 - alpha) * (1 - t)
    focal_weight = alpha_factor * jnp.power(1 - pt, gamma)
    bce = jnp.maximum(x, 0.0) - x * t + jnp.log1p(jnp.exp(-jnp.abs(x)))
    loss = focal_weight * bce
    return jnp.mean(loss) if reduction == "mean" else jnp.sum(loss)


if __name__ == "__main__":
    key = jax.random.PRNGKey(0)
    k1, k2, k3, k4 = jax.random.split(key, 4)

    # Small NCHW-shaped logits/targets (per-pixel binary segmentation head).
    B, C, H, W = 2, 4, 16, 16
    logits = jax.random.normal(k1, (B, C, H, W), dtype=jnp.float32) * 3.0
    targets = (jax.random.uniform(k2, (B, C, H, W)) > 0.9).astype(jnp.float32)

    loss_fn = jax.jit(lambda l, t: binary_focal_loss(
        l, t, alpha=0.01, gamma=2.0, reduction="mean"))
    loss = jax.block_until_ready(loss_fn(logits, targets))
    ref = binary_focal_loss_ref(logits, targets, alpha=0.01, gamma=2.0)
    # Default path uses the approximate EUP reciprocal for the sigmoid.
    assert jnp.allclose(loss, ref, rtol=5e-3, atol=1e-6), (loss, ref)

    # Unaligned element count: exercises the boundary-block row mask and the
    # pure-JAX tail epilogue, with the exact (non-approx) sigmoid path.
    shp = (3, 5, 7, 11)  # 1155 elements, not a multiple of 128
    logits2 = jax.random.normal(k3, shp, dtype=jnp.float32) * 3.0
    targets2 = (jax.random.uniform(k4, shp) > 0.9).astype(jnp.float32)
    loss2_fn = jax.jit(lambda l, t: binary_focal_loss(
        l, t, alpha=0.01, gamma=2.0, reduction="sum", approx_sigmoid=False))
    loss2 = jax.block_until_ready(loss2_fn(logits2, targets2))
    ref2 = binary_focal_loss_ref(logits2, targets2, alpha=0.01, gamma=2.0,
                                 reduction="sum")
    assert jnp.allclose(loss2, ref2, rtol=1e-4, atol=1e-6), (loss2, ref2)

    print("KERNEL_OK")
</pallas_src>

<mosaic_0001>
module attributes {stable_mosaic.version = 11 : i64} {
  func.func @_focal_loss_kernel(%arg0: i32, %arg1: i32, %arg2: memref<16x128xf32, #tpu.memory_space<vmem>>, %arg3: memref<16x128xf32, #tpu.memory_space<vmem>>, %arg4: memref<8x128xf32, #tpu.memory_space<vmem>>) attributes {dimension_semantics = [#tpu.dimension_semantics<parallel>, #tpu.dimension_semantics<arbitrary>], iteration_bounds = array<i64: 1, 1>, scalar_prefetch = 0 : i64, scratch_operands = 0 : i64, tpu.core_type = #tpu.core_type<tc>, window_params = [{transform_indices = @transform_0, window_bounds = array<i64: 16, 128>}, {transform_indices = @transform_1, window_bounds = array<i64: 16, 128>}, {transform_indices = @transform_2, window_bounds = array<i64: 8, 128>}]} {
    %c0_i32 = arith.constant 0 : i32
    %0 = arith.cmpi eq, %arg1, %c0_i32 : i32
    %1 = arith.extui %0 : i1 to i32
    %c0_i32_0 = arith.constant 0 : i32
    %2 = arith.cmpi ne, %1, %c0_i32_0 : i32
    scf.if %2 {
      %cst_18 = arith.constant 0.000000e+00 : f32
      %47 = vector.broadcast %cst_18 : f32 to vector<8x128xf32>
      %c0_19 = arith.constant 0 : index
      %c0_20 = arith.constant 0 : index
      %48 = vector.load %arg4[%c0_19, %c0_20] : memref<8x128xf32, #tpu.memory_space<vmem>>, vector<8x128xf32>
      tpu.vector_store %arg4[%c0_19, %c0_20], %47 {strides = array<i32>} : memref<8x128xf32, #tpu.memory_space<vmem>>, vector<8x128xf32>,
    } else {
    }
    %c1_i32 = arith.constant 1 : i32
    %3 = arith.muli %arg0, %c1_i32 : i32
    %4 = arith.addi %3, %arg1 : i32
    %c16_i32 = arith.constant 16 : i32
    %5 = arith.muli %4, %c16_i32 : i32
    %c0 = arith.constant 0 : index
    %c0_1 = arith.constant 0 : index
    %6 = vector.load %arg2[%c0, %c0_1] : memref<16x128xf32, #tpu.memory_space<vmem>>, vector<16x128xf32>
    %c0_2 = arith.constant 0 : index
    %c0_3 = arith.constant 0 : index
    %7 = vector.load %arg3[%c0_2, %c0_3] : memref<16x128xf32, #tpu.memory_space<vmem>>, vector<16x128xf32>
    %8 = math.absf %6 : vector<16x128xf32>
    %cst = arith.constant 0.000000e+00 : f32
    %9 = vector.broadcast %cst : f32 to vector<16x128xf32>
    %10 = arith.subf %9, %8 : vector<16x128xf32>
    %11 = math.exp %10 : vector<16x128xf32>
    %cst_4 = arith.constant 1.000000e+00 : f32
    %12 = vector.broadcast %cst_4 : f32 to vector<16x128xf32>
    %13 = arith.addf %12, %11 : vector<16x128xf32>
    %14 = tpu.reciprocal %13 {approx = true} : vector<16x128xf32> -> vector<16x128xf32>
    %cst_5 = arith.constant 0.000000e+00 : f32
    %15 = vector.broadcast %cst_5 : f32 to vector<16x128xf32>
    %16 = arith.cmpf oge, %6, %15 : vector<16x128xf32>
    %cst_6 = arith.constant 1.000000e+00 : f32
    %17 = vector.broadcast %cst_6 : f32 to vector<16x128xf32>
    %18 = arith.subf %17, %14 : vector<16x128xf32>
    %19 = arith.select %16, %14, %18 : vector<16x128xi1>, vector<16x128xf32>
    %20 = arith.addf %19, %7 : vector<16x128xf32>
    %21 = arith.mulf %19, %7 : vector<16x128xf32>
    %cst_7 = arith.constant 2.000000e+00 : f32
    %22 = vector.broadcast %cst_7 : f32 to vector<16x128xf32>
    %23 = arith.mulf %22, %21 : vector<16x128xf32>
    %24 = arith.subf %20, %23 : vector<16x128xf32>
    %cst_8 = arith.constant -9.800000e-01 : f32
    %25 = vector.broadcast %cst_8 : f32 to vector<16x128xf32>
    %26 = arith.mulf %25, %7 : vector<16x128xf32>
    %cst_9 = arith.constant 9.900000e-01 : f32
    %27 = vector.broadcast %cst_9 : f32 to vector<16x128xf32>
    %28 = arith.addf %27, %26 : vector<16x128xf32>
    %29 = arith.mulf %24, %24 : vector<16x128xf32>
    %30 = arith.mulf %28, %29 : vector<16x128xf32>
    %cst_10 = arith.constant 0.000000e+00 : f32
    %31 = vector.broadcast %cst_10 : f32 to vector<16x128xf32>
    %32 = arith.maximumf %6, %31 : vector<16x128xf32>
    %33 = arith.mulf %6, %7 : vector<16x128xf32>
    %34 = arith.subf %32, %33 : vector<16x128xf32>
    %35 = math.log1p %11 : vector<16x128xf32>
    %36 = arith.addf %34, %35 : vector<16x128xf32>
    %37 = arith.mulf %30, %36 : vector<16x128xf32>
    %c0_i32_11 = arith.constant 0 : i32
    %38 = arith.addi %5, %c0_i32_11 : i32
    %c16_i32_12 = arith.constant 16 : i32
    %39 = arith.addi %38, %c16_i32_12 : i32
    %c16_i32_13 = arith.constant 16 : i32
    %40 = arith.cmpi sle, %39, %c16_i32_13 : i32
    %41 = arith.extui %40 : i1 to i32
    %c0_i32_14 = arith.constant 0 : i32
    %42 = arith.cmpi ne, %41, %c0_i32_14 : i32
    scf.if %42 {
      %c0_18 = arith.constant 0 : index
      %c0_19 = arith.constant 0 : index
      %47 = vector.load %arg4[%c0_18, %c0_19] : memref<8x128xf32, #tpu.memory_space<vmem>>, vector<8x128xf32>
      %48 = vector.shape_cast %37 : vector<16x128xf32> to vector<2x8x128xf32>
      %cst_20 = arith.constant dense<0.000000e+00> : vector<8x128xf32>
      %49 = vector.multi_reduction <add>, %48, %cst_20 [0] : vector<2x8x128xf32> to vector<8x128xf32>
      %50 = arith.addf %47, %49 : vector<8x128xf32>
      %c0_21 = arith.constant 0 : index
      %c0_22 = arith.constant 0 : index
      %51 = vector.load %arg4[%c0_21, %c0_22] : memref<8x128xf32, #tpu.memory_space<vmem>>, vector<8x128xf32>
      tpu.vector_store %arg4[%c0_21, %c0_22], %50 {strides = array<i32>} : memref<8x128xf32, #tpu.memory_space<vmem>>, vector<8x128xf32>,
    } else {
    }
    %c16_i32_15 = arith.constant 16 : i32
    %43 = arith.addi %38, %c16_i32_15 : i32
    %c16_i32_16 = arith.constant 16 : i32
    %44 = arith.cmpi sgt, %43, %c16_i32_16 : i32
    %45 = arith.extui %44 : i1 to i32
    %c0_i32_17 = arith.constant 0 : i32
    %46 = arith.cmpi ne, %45, %c0_i32_17 : i32
    scf.if %46 {
      %47 = tpu.iota {dimensions = array<i32: 0>} : vector<16x128xi32>
      %48 = vector.broadcast %38 : i32 to vector<16x128xi32>
      %49 = arith.addi %48, %47 : vector<16x128xi32>
      %c0_18 = arith.constant 0 : index
      %c0_19 = arith.constant 0 : index
      %50 = vector.load %arg4[%c0_18, %c0_19] : memref<8x128xf32, #tpu.memory_space<vmem>>, vector<8x128xf32>
      %c16_i32_20 = arith.constant 16 : i32
      %51 = vector.broadcast %c16_i32_20 : i32 to vector<16x128xi32>
      %52 = arith.cmpi slt, %49, %51 : vector<16x128xi32>
      %cst_21 = arith.constant 0.000000e+00 : f32
      %53 = vector.broadcast %cst_21 : f32 to vector<16x128xf32>
      %54 = arith.select %52, %37, %53 : vector<16x128xi1>, vector<16x128xf32>
      %55 = vector.shape_cast %54 : vector<16x128xf32> to vector<2x8x128xf32>
      %cst_22 = arith.constant dense<0.000000e+00> : vector<8x128xf32>
      %56 = vector.multi_reduction <add>, %55, %cst_22 [0] : vector<2x8x128xf32> to vector<8x128xf32>
      %57 = arith.addf %50, %56 : vector<8x128xf32>
      %c0_23 = arith.constant 0 : index
      %c0_24 = arith.constant 0 : index
      %58 = vector.load %arg4[%c0_23, %c0_24] : memref<8x128xf32, #tpu.memory_space<vmem>>, vector<8x128xf32>
      tpu.vector_store %arg4[%c0_23, %c0_24], %57 {strides = array<i32>} : memref<8x128xf32, #tpu.memory_space<vmem>>, vector<8x128xf32>,
    } else {
    }
    return
  }
  func.func @transform_0(%arg0: i32, %arg1: i32) -> (i32, i32) {
    %c1_i32 = arith.constant 1 : i32
    %0 = arith.muli %arg0, %c1_i32 : i32
    %1 = arith.addi %0, %arg1 : i32
    %c0_i32 = arith.constant 0 : i32
    %2 = arith.minsi %1, %c0_i32 : i32
    %c0_i32_0 = arith.constant 0 : i32
    %c0_i32_1 = arith.constant 0 : i32
    return %2, %c0_i32_0 : i32, i32
  }
  func.func @transform_1(%arg0: i32, %arg1: i32) -> (i32, i32) {
    %c1_i32 = arith.constant 1 : i32
    %0 = arith.muli %arg0, %c1_i32 : i32
    %1 = arith.addi %0, %arg1 : i32
    %c0_i32 = arith.constant 0 : i32
    %2 = arith.minsi %1, %c0_i32 : i32
    %c0_i32_0 = arith.constant 0 : i32
    %c0_i32_1 = arith.constant 0 : i32
    return %2, %c0_i32_0 : i32, i32
  }
  func.func @transform_2(%arg0: i32, %arg1: i32) -> (i32, i32) {
    %c0_i32 = arith.constant 0 : i32
    %c0_i32_0 = arith.constant 0 : i32
    return %arg0, %c0_i32 : i32, i32
  }
}

</mosaic_0001>

<llo_original>
// kernel: _lambda_.1
$region0: #{_lambda_.1}
  #allocation0 [shape = 'u32[]', space=smem, size = 0x4, offset = 0x4, fixed_abs, tag = 'smem constant byte address 0x4 - core index']
  #allocation1 [shape = 'u32[144,128]{1,0:T(1,128)}', space=vmem, size = 0x12000, scoped, tag = 'internal scratch']
  %s0 = inlined_call_operand.vmem [shape: f32[16,128], index: 0, kind: input, shape index: {}]
  %s1 = inlined_call_operand.vmem [shape: f32[16,128], index: 1, kind: input, shape index: {}]
  %s2 = inlined_call_operand.vmem [shape: f32[8,128], index: 2, kind: output, shape index: {}]
  %s3 = sld [smem:[#allocation0]]
  $region30: #{_lambda_.1} parent=0
    _
  %s5 = ssub.s32 1, %s3
  %s6 = scalar_select 0, %s5, %s3
  // Predicated region
  $region2: #{_lambda_.1} parent=0 // pred_check
    _
  $region3: #{_lambda_.1} parent=0 // pred_check_branch
    %8 = sbr.rel (0) target = $region5
  $region4: #{_lambda_.1} parent=0 // pred_region
    %s9 = sadd.s32 0, 0
    %p10 = scmp.lt.s32.totalorder %s9, 0
    %s11 = scalar_select %p10, %s9, 0
    %s12 = smul.u32 2, %s11
    %p13 = scmp.lt.s32.totalorder %s12, 1
    %s14 = scalar_select %p13, %s12, 1
    %s15 = smul.addr %s14, 8
    %s16 = scalar_lea.vmem %s0, %s15
    %s17 = sadd.s32 0, 0
    %p18 = scmp.lt.s32.totalorder %s17, 0
    %s19 = scalar_select %p18, %s17, 0
    %s20 = smul.u32 2, %s19
  $region5: #{_lambda_.1} parent=0 // pred_fallthru
    _
  // Predicated region
  $region6: #{_lambda_.1} parent=0 // pred_check
    _
  $region7: #{_lambda_.1} parent=0 // pred_check_branch
    %22 = sbr.rel (0) target = $region9
  $region8: #{_lambda_.1} parent=0 // pred_region
    %s23 = sadd.s32 0, 0
    %p24 = scmp.lt.s32.totalorder %s23, 0
    %s25 = scalar_select %p24, %s23, 0
    %s26 = smul.u32 2, %s25
    %p27 = scmp.lt.s32.totalorder %s26, 1
    %s28 = scalar_select %p27, %s26, 1
    %s29 = smul.addr %s28, 8
    %s30 = scalar_lea.vmem %s1, %s29
    %s31 = sadd.s32 0, 0
    %p32 = scmp.lt.s32.totalorder %s31, 0
    %s33 = scalar_select %p32, %s31, 0
    %s34 = smul.u32 2, %s33
  $region9: #{_lambda_.1} parent=0 // pred_fallthru
    _
  %s35 = sadd.s32 0, 0
  %p36 = scmp.lt.s32.totalorder %s35, 0
  %s37 = scalar_select %p36, %s35, 0
  %s38 = smul.u32 2, %s37
  %p39 = scmp.lt.s32.totalorder %s38, 1
  %s40 = scalar_select %p39, %s38, 1
  %s41 = smul.addr %s40, 8
  %s42 = scalar_lea.vmem %s0, %s41
  %s43 = sadd.s32 0, 0
  %p44 = scmp.lt.s32.totalorder %s43, 0
  %s45 = scalar_select %p44, %s43, 0
  %s46 = smul.u32 2, %s45
  %p47 = scmp.lt.s32.totalorder %s46, 1
  %s48 = scalar_select %p47, %s46, 1
  %s49 = smul.addr %s48, 8
  %s50 = scalar_lea.vmem %s1, %s49
  %s51 = sadd.s32 0, 0
  %p52 = scmp.lt.s32.totalorder %s51, 0
  %s53 = scalar_select %p52, %s51, 0
  %s54 = smul.u32 2, %s53
  %p55 = scmp.lt.s32.totalorder %s54, 1
  %s56 = scalar_select %p55, %s54, 1
  %s57 = smul.addr %s56, 8
  %s58 = scalar_lea.vmem %s0, %s57
  %s59 = sadd.s32 0, 0
  %p60 = scmp.lt.s32.totalorder %s59, 0
  %s61 = scalar_select %p60, %s59, 0
  %s62 = smul.u32 2, %s61
  %s63 = sadd.s32 0, 0
  %p64 = scmp.lt.s32.totalorder %s63, 0
  %s65 = scalar_select %p64, %s63, 0
  %s66 = smul.u32 2, %s65
  %p67 = scmp.lt.s32.totalorder %s66, 1
  %s68 = scalar_select %p67, %s66, 1
  %s69 = smul.addr %s68, 8
  %s70 = scalar_lea.vmem %s1, %s69
  %s71 = sadd.s32 0, 0
  %p72 = scmp.lt.s32.totalorder %s71, 0
  %s73 = scalar_select %p72, %s71, 0
  %s74 = smul.u32 2, %s73
  %p75 = scmp.eq.s32.totalorder 0, 0
  // Predicated region
  $region10: #{_lambda_.1} parent=0 // pred_check
    %p76 = pneg %p75
  $region11: #{_lambda_.1} parent=0 // pred_check_branch
    %78 = sbr.rel (%p76) target = $region13
  $region12: #{_lambda_.1} parent=0 // pred_region
    %79 = vst [vmem:[%s2] sm:$0xff] 0.0
  $region13: #{_lambda_.1} parent=0 // pred_fallthru
    _
  %s80 = sadd.s32 0, 0
  %s81 = smul.u32 %s80, 16
  %v82 = vld [vmem:[%s58] sm:$0xff]
  %v83 = vld [vmem:[%s58 + $0x8] sm:$0xff]
  %v84 = vld [vmem:[%s70] sm:$0xff]
  %v85 = vld [vmem:[%s70 + $0x8] sm:$0xff]
  %v86 = vand.u32 2147483647, %v82
  %v87 = vand.u32 2147483647, %v83
  %v88 = vsub.f32 0.0, %v86
  %v89 = vsub.f32 0.0, %v87
  %v90 = vmul.f32 %v88, 1.442695
  %v91 = vpow.pop %v90
  %v92 = vmul.f32 %v89, 1.442695
  %v93 = vpow.pop %v92
  %v94 = vadd.f32 %v91, 1.0
  %v95 = vadd.f32 %v93, 1.0
  %v96 = vrcp.pop %v94
  %v97 = vrcp.pop %v95
  %vm98 = vcmp.ge.f32.partialorder %v82, 0.0
  %vm99 = vcmp.ge.f32.partialorder %v83, 0.0
  %v100 = vsub.f32 1.0, %v96
  %v101 = vsub.f32 1.0, %v97
  %v102 = vsel %vm98, %v96, %v100
  %v103 = vsel %vm99, %v97, %v101
  %v104 = vadd.f32 %v102, %v84
  %v105 = vadd.f32 %v103, %v85
  %v106 = vmul.f32 %v102, %v84
  %v107 = vmul.f32 %v103, %v85
  %v108 = vmul.f32 %v106, 2.0
  %v109 = vmul.f32 %v107, 2.0
  %v110 = vsub.f32 %v104, %v108
  %v111 = vsub.f32 %v105, %v109
  %v112 = vmul.f32 %v84, -0.98
  %v113 = vmul.f32 %v85, -0.98
  %v114 = vadd.f32 %v112, 0.99
  %v115 = vadd.f32 %v113, 0.99
  %v116 = vmul.f32 %v110, %v110
  %v117 = vmul.f32 %v111, %v111
  %v118 = vmul.f32 %v114, %v116
  %v119 = vmul.f32 %v115, %v117
  %v120 = vmax.f32 %v82, 0.0
  %v121 = vmax.f32 %v83, 0.0
  %v122 = vmul.f32 %v82, %v84
  %v123 = vmul.f32 %v83, %v85
  %v124 = vsub.f32 %v120, %v122
  %v125 = vsub.f32 %v121, %v123
  %v126 = vadd.f32 %v91, 1.0
  %v127 = vlog2.pop %v126
  %v128 = vmul.f32 %v127, 0.6931472
  %v129 = vmul.f32 -0.5, %v91
  %v130 = vadd.f32 %v129, 1.0
  %v131 = vmul.f32 %v130, %v91
  %v132 = vand.u32 2147483647, %v91
  %vm133 = vcmp.lt.f32.partialorder %v132, 0.0004427343
  %v134 = vsel %vm133, %v131, %v128
  %v135 = vadd.f32 %v93, 1.0
  %v136 = vlog2.pop %v135
  %v137 = vmul.f32 %v136, 0.6931472
  %v138 = vmul.f32 -0.5, %v93
  %v139 = vadd.f32 %v138, 1.0
  %v140 = vmul.f32 %v139, %v93
  %v141 = vand.u32 2147483647, %v93
  %vm142 = vcmp.lt.f32.partialorder %v141, 0.0004427343
  %v143 = vsel %vm142, %v140, %v137
  %v144 = vadd.f32 %v124, %v134
  %v145 = vadd.f32 %v125, %v143
  %v146 = vmul.f32 %v118, %v144
  %v147 = vmul.f32 %v119, %v145
  %s148 = sadd.s32 %s81, 16
  %p149 = scmp.le.s32.totalorder %s148, 16
  // Predicated region
  $region14: #{_lambda_.1} parent=0 // pred_check
    %p150 = pneg %p149
  $region15: #{_lambda_.1} parent=0 // pred_check_branch
    %152 = sbr.rel (%p150) target = $region17
  $region16: #{_lambda_.1} parent=0 // pred_region
    %v153 = vld [vmem:[%s2] sm:$0xff]
    %v154 = vadd.f32 %v146, %v147
    %v155 = vadd.f32 %v153, %v154
    %156 = vst [vmem:[%s2] sm:$0xff] %v155
  $region17: #{_lambda_.1} parent=0 // pred_fallthru
    _
  %p157 = scmp.gt.s32.totalorder %s148, 16
  // Predicated region
  $region18: #{_lambda_.1} parent=0 // pred_check
    %p158 = pneg %p157
  $region19: #{_lambda_.1} parent=0 // pred_check_branch
    %160 = sbr.rel (%p158) target = $region21
  $region20: #{_lambda_.1} parent=0 // pred_region
    %v161 = vlaneseq
    %v162 = vshrl.u32 %v161, 7
    %v163 = vadd.s32 %v162, 8
    %v164 = vstv %s81
    %v165 = vadd.s32 %v164, %v162
    %v166 = vadd.s32 %v164, %v163
    %v167 = vld [vmem:[%s2] sm:$0xff]
    %vm168 = vcmp.lt.s32.totalorder %v165, 16
    %vm169 = vcmp.lt.s32.totalorder %v166, 16
    %v170 = vsel %vm168, %v146, 0.0
    %v171 = vsel %vm169, %v147, 0.0
    %v172 = vadd.f32 %v170, %v171
    %v173 = vadd.f32 %v167, %v172
    %174 = vst [vmem:[%s2] sm:$0xff] %v173
  $region21: #{_lambda_.1} parent=0 // pred_fallthru
    _
  // Predicated region
  $region22: #{_lambda_.1} parent=0 // pred_check
    _
  $region23: #{_lambda_.1} parent=0 // pred_check_branch
    %176 = sbr.rel (0) target = $region25
  $region24: #{_lambda_.1} parent=0 // pred_region
    _
  $region25: #{_lambda_.1} parent=0 // pred_fallthru
    _
  // Predicated region
  $region26: #{_lambda_.1} parent=0 // pred_check
    _
  $region27: #{_lambda_.1} parent=0 // pred_check_branch
    %178 = sbr.rel (0) target = $region29
  $region28: #{_lambda_.1} parent=0 // pred_region
    _
  $region29: #{_lambda_.1} parent=0 // pred_fallthru
    _

</llo_original>
